<compile_context>
chip_gen: v6e
topology: v6e:2x2x1
jax: 0.10.0
libtpu: 0.0.40
codegen_flags: <defaults>
</compile_context>

<pallas_src>
import functools

import jax
import jax.numpy as jnp
from jax.experimental import pallas as pl
from jax.experimental.pallas import tpu as pltpu


def _tree_transformer_kernel(
    feats_ref,   # (N, D)    f32   embedded + zero-padded node features
    A_ref,       # (E, N, N) bf16  adjacency per edge type, A[e, dst, src]
    abias_ref,   # (N, D)    f32   precomputed sum_e in_degree_e * b_e
    M_ref,       # (G, N)    f32   graph membership
    Mt_ref,      # (N, G)    f32   membership transposed
    Wcat_ref,    # (D, E*D)  bf16  fused per-etype Linear weights
    Wih_ref,     # (D, 3*D)  bf16  fused GRU input weights (r, z, n)
    Whh_ref,     # (D, 3*D)  bf16  fused GRU hidden weights (r, z, n)
    bih_ref,     # (1, 3*D)  f32
    bhh_ref,     # (1, 3*D)  f32
    gw_ref,      # (1, D)    f32   gate_nn weight as a row
    gb_ref,      # (1, 1)    f32   gate_nn bias
    out_ref,     # (G, D)    f32   pooled graph readout
    *,
    n_steps: int,
    n_etypes: int,
):
    N, D = feats_ref.shape
    E = n_etypes

    # ---- Hoist all weight / constant loads out of the recurrence ----
    A = A_ref[...]            # (E, N, N) bf16
    abias = abias_ref[...]    # (N, D)    f32
    Wcat = Wcat_ref[...]      # (D, E*D)  bf16
    Wih = Wih_ref[...]        # (D, 3D)   bf16
    Whh = Whh_ref[...]        # (D, 3D)   bf16
    bih = bih_ref[...]        # (1, 3D)   f32
    bhh = bhh_ref[...]        # (1, 3D)   f32

    # ---- Gated Graph Conv: n_steps of message passing + GRUCell ----
    def step(_, h):
        h_b = h.astype(jnp.bfloat16)

        # Fused per-etype messages: one wide matmul, then slice per etype.
        msgs = jnp.dot(h_b, Wcat, preferred_element_type=jnp.float32)  # (N, E*D)
        msgs_b = msgs.astype(jnp.bfloat16)

        # Aggregate over incoming edges; per-etype bias folded into abias.
        a = abias
        for e in range(E):
            a = a + jnp.dot(A[e], msgs_b[:, e * D:(e + 1) * D],
                            preferred_element_type=jnp.float32)

        # torch.nn.GRUCell (gate order: reset, update, new), fused matmuls.
        gi = jnp.dot(a.astype(jnp.bfloat16), Wih,
                     preferred_element_type=jnp.float32) + bih            # (N, 3D)
        gh = jnp.dot(h_b, Whh, preferred_element_type=jnp.float32) + bhh  # (N, 3D)

        r = jax.nn.sigmoid(gi[:, 0:D] + gh[:, 0:D])
        z = jax.nn.sigmoid(gi[:, D:2 * D] + gh[:, D:2 * D])
        n = jnp.tanh(gi[:, 2 * D:3 * D] + r * gh[:, 2 * D:3 * D])
        return (1.0 - z) * n + z * h

    h = jax.lax.fori_loop(0, n_steps, step, feats_ref[...])

    # ---- GlobalAttentionPooling: per-graph softmax of gate_nn(h) ----
    Mt = Mt_ref[...]                                                  # (N, G)
    M = M_ref[...]                                                    # (G, N)

    # Width-1 output: use VPU/XLU reduce instead of the MXU.
    logit = jnp.sum(h * gw_ref[...], axis=-1, keepdims=True) + gb_ref[...]  # (N, 1)

    neg = jnp.float32(-1e30)
    masked = jnp.where(Mt > 0.5, logit, neg)                          # (N, G)
    gmax = jnp.max(masked, axis=0, keepdims=True)                     # (1, G)
    gmax_pn = jnp.sum(Mt * gmax, axis=1, keepdims=True)               # (N, 1)
    alpha = jnp.exp(logit - gmax_pn)                                  # (N, 1)
    denom = jnp.sum(Mt * alpha, axis=0, keepdims=True)                # (1, G)
    denom_pn = jnp.sum(Mt * denom, axis=1, keepdims=True)             # (N, 1)
    denom_pn = jnp.maximum(denom_pn, jnp.float32(1e-30))              # empty-graph guard
    gate = alpha * pl.reciprocal(denom_pn, approx=True)               # (N, 1)

    out_ref[...] = jnp.dot(M, gate * h, preferred_element_type=jnp.float32)  # (G, D)


def tree_transformer_forward(ids, A, M, params, *, n_steps):
    """Runs the full TreeTransformer forward pass in one Pallas kernel."""
    emb, Wt, bl, wih, whh, bih, bhh, gw, gb = params
    N = ids.shape[0]
    G = M.shape[0]
    E, _, D = Wt.shape
    Din = emb.shape[1]

    # Embedding gather + zero-pad to out_feats in plain XLA (cheap; avoids an
    # (N, V) one-hot matmul inside the kernel and makes the first store a
    # clean lane-aligned (N, D) tile).
    feats = jnp.take(emb, ids.astype(jnp.int32), axis=0)              # (N, Din)
    feats = jnp.pad(feats, ((0, 0), (0, D - Din))).astype(jnp.float32)

    # Fused per-etype message weights (D, E*D): msgs[:, e*D:(e+1)*D] = h @ Wt[e].
    Wcat = jnp.transpose(Wt, (1, 0, 2)).reshape(D, E * D).astype(jnp.bfloat16)

    # Per-etype Linear bias contribution to the aggregated message is constant
    # across steps: abias[dst] = sum_e in_degree_e[dst] * b_e.
    deg = jnp.sum(A, axis=2)                                          # (E, N)
    abias = (deg.T @ bl.reshape(E, D)).astype(jnp.float32)            # (N, D)

    # Fused GRU weights (gate order r, z, n).
    Wih = jnp.transpose(wih, (1, 0, 2)).reshape(D, 3 * D).astype(jnp.bfloat16)
    Whh = jnp.transpose(whh, (1, 0, 2)).reshape(D, 3 * D).astype(jnp.bfloat16)
    bih_c = bih.reshape(1, 3 * D).astype(jnp.float32)
    bhh_c = bhh.reshape(1, 3 * D).astype(jnp.float32)

    inputs = (
        feats,
        A.astype(jnp.bfloat16),                                       # 0/1 exact in bf16
        abias,
        M.astype(jnp.float32),
        M.T.astype(jnp.float32),
        Wcat, Wih, Whh, bih_c, bhh_c,
        gw.reshape(1, D).astype(jnp.float32),
        gb.reshape(1, 1).astype(jnp.float32),
    )

    # Advisory cost estimate so XLA schedules around the custom call sensibly.
    flops = int(
        n_steps * (2 * N * D * (E * D)            # fused message matmul
                   + E * 2 * N * N * D            # per-etype aggregation
                   + 2 * (2 * N * D * (3 * D)))   # fused GRU matmuls
        + 2 * G * N * D                           # pooling matmul
    )
    transcendentals = int(n_steps * 3 * N * D + N)
    bytes_accessed = int(
        feats.size * 4 + A.size * 2 + abias.size * 4
        + 2 * G * N * 4
        + (Wcat.size + Wih.size + Whh.size) * 2
        + (bih_c.size + bhh_c.size + D + 1) * 4
        + G * D * 4
    )
    cost = pl.CostEstimate(flops=flops, transcendentals=transcendentals,
                           bytes_accessed=bytes_accessed)

    kernel = functools.partial(_tree_transformer_kernel,
                               n_steps=n_steps, n_etypes=E)
    return pl.pallas_call(
        kernel,
        out_shape=jax.ShapeDtypeStruct((G, D), jnp.float32),
        in_specs=[pl.BlockSpec(memory_space=pltpu.MemorySpace.VMEM)] * len(inputs),
        out_specs=pl.BlockSpec(memory_space=pltpu.MemorySpace.VMEM),
        compiler_params=pltpu.CompilerParams(
            vmem_limit_bytes=32 * 1024 * 1024),
        cost_estimate=cost,
    )(*inputs)


def tree_transformer_reference(ids, A, M, params, *, n_steps):
    """Pure-JAX f32 reference implementing the same semantics."""
    emb, Wt, bl, wih, whh, bih, bhh, gw, gb = params
    N = ids.shape[0]
    D = Wt.shape[-1]
    Din = emb.shape[1]
    feats = emb[ids]
    h = jnp.concatenate([feats, jnp.zeros((N, D - Din), jnp.float32)], axis=1)
    for _ in range(n_steps):
        a = jnp.zeros((N, D), jnp.float32)
        for e in range(A.shape[0]):
            a = a + A[e] @ (h @ Wt[e] + bl[e])
        r = jax.nn.sigmoid(a @ wih[0] + bih[0] + h @ whh[0] + bhh[0])
        z = jax.nn.sigmoid(a @ wih[1] + bih[1] + h @ whh[1] + bhh[1])
        n = jnp.tanh(a @ wih[2] + bih[2] + r * (h @ whh[2] + bhh[2]))
        h = (1.0 - z) * n + z * h
    logit = (h @ gw + gb)[:, 0]                                       # (N,)
    masked = jnp.where(M > 0.5, logit[None, :], -1e30)                # (G, N)
    gmax = jnp.max(masked, axis=1, keepdims=True)                     # (G, 1)
    alpha = jnp.exp(logit[None, :] - gmax) * M                        # (G, N)
    gate = alpha / jnp.sum(alpha, axis=1, keepdims=True)              # (G, N)
    return gate @ h                                                   # (G, D)


if __name__ == "__main__":
    # Small synthetic "batched graph": N nodes split into G graphs.
    V, Din, D = 32, 16, 32          # vocab, in_feats, out_feats
    N, E, G = 16, 2, 2              # nodes, n_etypes, num graphs
    N_STEPS = 3                     # ggnn n_steps

    key = jax.random.PRNGKey(0)
    ks = jax.random.split(key, 12)

    # Deterministic parameters (synthetic, not a checkpoint).
    emb = 0.1 * jax.random.normal(ks[0], (V, Din), jnp.float32)
    Wt  = 0.1 * jax.random.normal(ks[1], (E, D, D), jnp.float32)      # pre-transposed
    bl  = 0.1 * jax.random.normal(ks[2], (E, 1, D), jnp.float32)
    wih = 0.1 * jax.random.normal(ks[3], (3, D, D), jnp.float32)      # pre-transposed
    whh = 0.1 * jax.random.normal(ks[4], (3, D, D), jnp.float32)      # pre-transposed
    bih = 0.1 * jax.random.normal(ks[5], (3, 1, D), jnp.float32)
    bhh = 0.1 * jax.random.normal(ks[6], (3, 1, D), jnp.float32)
    gw  = 0.1 * jax.random.normal(ks[7], (D, 1), jnp.float32)
    gb  = jnp.zeros((1, 1), jnp.float32)
    params = (emb, Wt, bl, wih, whh, bih, bhh, gw, gb)

    # Node token ids (graph.ndata['x']).
    ids = jax.random.randint(ks[8], (N,), 0, V, jnp.int32)

    # Graph membership: first half of nodes -> graph 0, second half -> graph 1.
    graph_id = jnp.concatenate(
        [jnp.zeros(N // 2, jnp.int32), jnp.ones(N - N // 2, jnp.int32)])
    M = (jnp.arange(G)[:, None] == graph_id[None, :]).astype(jnp.float32)

    # Dense per-etype adjacency A[e, dst, src]; no cross-graph edges.
    same_graph = (graph_id[:, None] == graph_id[None, :]).astype(jnp.float32)
    A = (jax.random.uniform(ks[9], (E, N, N)) < 0.25).astype(jnp.float32)
    A = A * same_graph[None, :, :]

    out = tree_transformer_forward(ids, A, M, params, n_steps=N_STEPS)
    out = jax.block_until_ready(out)

    ref = tree_transformer_reference(ids, A, M, params, n_steps=N_STEPS)
    assert out.shape == (G, D)
    # bf16 MXU operands vs f32 reference -> looser tolerance.
    assert jnp.allclose(out, ref, rtol=2e-2, atol=5e-3), (out, ref)

    print("KERNEL_OK")
</pallas_src>

<mosaic_0001>
module attributes {stable_mosaic.version = 11 : i64} {
  func.func @_tree_transformer_kernel(%arg0: memref<16x32xf32, #tpu.memory_space<vmem>>, %arg1: memref<2x16x16xbf16, #tpu.memory_space<vmem>>, %arg2: memref<16x32xf32, #tpu.memory_space<vmem>>, %arg3: memref<2x16xf32, #tpu.memory_space<vmem>>, %arg4: memref<16x2xf32, #tpu.memory_space<vmem>>, %arg5: memref<32x64xbf16, #tpu.memory_space<vmem>>, %arg6: memref<32x96xbf16, #tpu.memory_space<vmem>>, %arg7: memref<32x96xbf16, #tpu.memory_space<vmem>>, %arg8: memref<1x96xf32, #tpu.memory_space<vmem>>, %arg9: memref<1x96xf32, #tpu.memory_space<vmem>>, %arg10: memref<1x32xf32, #tpu.memory_space<vmem>>, %arg11: memref<1x1xf32, #tpu.memory_space<vmem>>, %arg12: memref<2x32xf32, #tpu.memory_space<vmem>>) attributes {dimension_semantics = [], scalar_prefetch = 0 : i64, scratch_operands = 0 : i64, tpu.core_type = #tpu.core_type<tc>} {
    %c0 = arith.constant 0 : index
    %c0_0 = arith.constant 0 : index
    %c0_1 = arith.constant 0 : index
    %0 = vector.load %arg1[%c0, %c0_0, %c0_1] : memref<2x16x16xbf16, #tpu.memory_space<vmem>>, vector<2x16x16xbf16>
    %c0_2 = arith.constant 0 : index
    %c0_3 = arith.constant 0 : index
    %1 = vector.load %arg2[%c0_2, %c0_3] : memref<16x32xf32, #tpu.memory_space<vmem>>, vector<16x32xf32>
    %c0_4 = arith.constant 0 : index
    %c0_5 = arith.constant 0 : index
    %2 = vector.load %arg5[%c0_4, %c0_5] : memref<32x64xbf16, #tpu.memory_space<vmem>>, vector<32x64xbf16>
    %c0_6 = arith.constant 0 : index
    %c0_7 = arith.constant 0 : index
    %3 = vector.load %arg6[%c0_6, %c0_7] : memref<32x96xbf16, #tpu.memory_space<vmem>>, vector<32x96xbf16>
    %c0_8 = arith.constant 0 : index
    %c0_9 = arith.constant 0 : index
    %4 = vector.load %arg7[%c0_8, %c0_9] : memref<32x96xbf16, #tpu.memory_space<vmem>>, vector<32x96xbf16>
    %c0_10 = arith.constant 0 : index
    %c0_11 = arith.constant 0 : index
    %5 = vector.load %arg8[%c0_10, %c0_11] : memref<1x96xf32, #tpu.memory_space<vmem>>, vector<1x96xf32>
    %c0_12 = arith.constant 0 : index
    %c0_13 = arith.constant 0 : index
    %6 = vector.load %arg9[%c0_12, %c0_13] : memref<1x96xf32, #tpu.memory_space<vmem>>, vector<1x96xf32>
    %c0_14 = arith.constant 0 : index
    %c0_15 = arith.constant 0 : index
    %7 = vector.load %arg0[%c0_14, %c0_15] : memref<16x32xf32, #tpu.memory_space<vmem>>, vector<16x32xf32>
    %c0_i32 = arith.constant 0 : i32
    %c3_i32 = arith.constant 3 : i32
    %8 = arith.addi %c0_i32, %c3_i32 : i32
    %c1_i32 = arith.constant 1 : i32
    %9 = scf.for %arg13 = %c0_i32 to %8 step %c1_i32 iter_args(%arg14 = %7) -> (vector<16x32xf32>)  : i32 {
      %50 = arith.truncf %arg14 : vector<16x32xf32> to vector<16x32xbf16>
      %cst_34 = arith.constant dense<0.000000e+00> : vector<16x64xf32>
      %51 = tpu.matmul %50, %2, %cst_34 {dimension_numbers = #tpu.dot_dimension_numbers<[1], [0], [0], [1], [0, 0, 1, 1], [], []>} : vector<16x32xbf16>, vector<32x64xbf16>, vector<16x64xf32> -> vector<16x64xf32>
      %52 = arith.truncf %51 : vector<16x64xf32> to vector<16x64xbf16>
      %53 = vector.extract_strided_slice %0 {offsets = [0, 0, 0], sizes = [1, 16, 16], strides = [1, 1, 1]} : vector<2x16x16xbf16> to vector<1x16x16xbf16>
      %54 = vector.shape_cast %53 : vector<1x16x16xbf16> to vector<16x16xbf16>
      %55 = vector.extract_strided_slice %52 {offsets = [0, 0], sizes = [16, 32], strides = [1, 1]} : vector<16x64xbf16> to vector<16x32xbf16>
      %cst_35 = arith.constant dense<0.000000e+00> : vector<16x32xf32>
      %56 = tpu.matmul %54, %55, %cst_35 {dimension_numbers = #tpu.dot_dimension_numbers<[1], [0], [0], [1], [0, 0, 1, 1], [], []>} : vector<16x16xbf16>, vector<16x32xbf16>, vector<16x32xf32> -> vector<16x32xf32>
      %57 = arith.addf %1, %56 : vector<16x32xf32>
      %58 = vector.extract_strided_slice %0 {offsets = [1, 0, 0], sizes = [1, 16, 16], strides = [1, 1, 1]} : vector<2x16x16xbf16> to vector<1x16x16xbf16>
      %59 = vector.shape_cast %58 : vector<1x16x16xbf16> to vector<16x16xbf16>
      %60 = vector.extract_strided_slice %52 {offsets = [0, 32], sizes = [16, 32], strides = [1, 1]} : vector<16x64xbf16> to vector<16x32xbf16>
      %cst_36 = arith.constant dense<0.000000e+00> : vector<16x32xf32>
      %61 = tpu.matmul %59, %60, %cst_36 {dimension_numbers = #tpu.dot_dimension_numbers<[1], [0], [0], [1], [0, 0, 1, 1], [], []>} : vector<16x16xbf16>, vector<16x32xbf16>, vector<16x32xf32> -> vector<16x32xf32>
      %62 = arith.addf %57, %61 : vector<16x32xf32>
      %63 = arith.truncf %62 : vector<16x32xf32> to vector<16x32xbf16>
      %cst_37 = arith.constant dense<0.000000e+00> : vector<16x96xf32>
      %64 = tpu.matmul %63, %3, %cst_37 {dimension_numbers = #tpu.dot_dimension_numbers<[1], [0], [0], [1], [0, 0, 1, 1], [], []>} : vector<16x32xbf16>, vector<32x96xbf16>, vector<16x96xf32> -> vector<16x96xf32>
      %65 = vector.broadcast %5 : vector<1x96xf32> to vector<16x96xf32>
      %66 = arith.addf %64, %65 : vector<16x96xf32>
      %cst_38 = arith.constant dense<0.000000e+00> : vector<16x96xf32>
      %67 = tpu.matmul %50, %4, %cst_38 {dimension_numbers = #tpu.dot_dimension_numbers<[1], [0], [0], [1], [0, 0, 1, 1], [], []>} : vector<16x32xbf16>, vector<32x96xbf16>, vector<16x96xf32> -> vector<16x96xf32>
      %68 = vector.broadcast %6 : vector<1x96xf32> to vector<16x96xf32>
      %69 = arith.addf %67, %68 : vector<16x96xf32>
      %70 = vector.extract_strided_slice %66 {offsets = [0, 0], sizes = [16, 32], strides = [1, 1]} : vector<16x96xf32> to vector<16x32xf32>
      %71 = vector.extract_strided_slice %69 {offsets = [0, 0], sizes = [16, 32], strides = [1, 1]} : vector<16x96xf32> to vector<16x32xf32>
      %72 = arith.addf %70, %71 : vector<16x32xf32>
      %73 = arith.negf %72 : vector<16x32xf32>
      %74 = math.exp %73 : vector<16x32xf32>
      %cst_39 = arith.constant 1.000000e+00 : f32
      %75 = vector.broadcast %cst_39 : f32 to vector<16x32xf32>
      %76 = arith.addf %75, %74 : vector<16x32xf32>
      %77 = arith.divf %75, %76 : vector<16x32xf32>
      %78 = vector.extract_strided_slice %66 {offsets = [0, 32], sizes = [16, 32], strides = [1, 1]} : vector<16x96xf32> to vector<16x32xf32>
      %79 = vector.extract_strided_slice %69 {offsets = [0, 32], sizes = [16, 32], strides = [1, 1]} : vector<16x96xf32> to vector<16x32xf32>
      %80 = arith.addf %78, %79 : vector<16x32xf32>
      %81 = arith.negf %80 : vector<16x32xf32>
      %82 = math.exp %81 : vector<16x32xf32>
      %cst_40 = arith.constant 1.000000e+00 : f32
      %83 = vector.broadcast %cst_40 : f32 to vector<16x32xf32>
      %84 = arith.addf %83, %82 : vector<16x32xf32>
      %85 = arith.divf %83, %84 : vector<16x32xf32>
      %86 = vector.extract_strided_slice %66 {offsets = [0, 64], sizes = [16, 32], strides = [1, 1]} : vector<16x96xf32> to vector<16x32xf32>
      %87 = vector.extract_strided_slice %69 {offsets = [0, 64], sizes = [16, 32], strides = [1, 1]} : vector<16x96xf32> to vector<16x32xf32>
      %88 = arith.mulf %77, %87 : vector<16x32xf32>
      %89 = arith.addf %86, %88 : vector<16x32xf32>
      %90 = math.tanh %89 : vector<16x32xf32>
      %cst_41 = arith.constant 1.000000e+00 : f32
      %91 = vector.broadcast %cst_41 : f32 to vector<16x32xf32>
      %92 = arith.subf %91, %85 : vector<16x32xf32>
      %93 = arith.mulf %92, %90 : vector<16x32xf32>
      %94 = arith.mulf %85, %arg14 : vector<16x32xf32>
      %95 = arith.addf %93, %94 : vector<16x32xf32>
      scf.yield %95 : vector<16x32xf32>
    }
    %c0_16 = arith.constant 0 : index
    %c0_17 = arith.constant 0 : index
    %10 = vector.load %arg4[%c0_16, %c0_17] : memref<16x2xf32, #tpu.memory_space<vmem>>, vector<16x2xf32>
    %c0_18 = arith.constant 0 : index
    %c0_19 = arith.constant 0 : index
    %11 = vector.load %arg3[%c0_18, %c0_19] : memref<2x16xf32, #tpu.memory_space<vmem>>, vector<2x16xf32>
    %c0_20 = arith.constant 0 : index
    %c0_21 = arith.constant 0 : index
    %12 = vector.load %arg10[%c0_20, %c0_21] : memref<1x32xf32, #tpu.memory_space<vmem>>, vector<1x32xf32>
    %13 = vector.broadcast %12 : vector<1x32xf32> to vector<16x32xf32>
    %14 = arith.mulf %9, %13 : vector<16x32xf32>
    %cst = arith.constant dense<0.000000e+00> : vector<16xf32>
    %15 = vector.multi_reduction <add>, %14, %cst [1] : vector<16x32xf32> to vector<16xf32>
    %16 = vector.shape_cast %15 : vector<16xf32> to vector<16x1xf32>
    %c0_22 = arith.constant 0 : index
    %c0_23 = arith.constant 0 : index
    %17 = vector.load %arg11[%c0_22, %c0_23] : memref<1x1xf32, #tpu.memory_space<vmem>>, vector<1x1xf32>
    %18 = vector.broadcast %17 : vector<1x1xf32> to vector<16x1xf32>
    %19 = arith.addf %16, %18 : vector<16x1xf32>
    %cst_24 = arith.constant 5.000000e-01 : f32
    %20 = vector.broadcast %cst_24 : f32 to vector<16x2xf32>
    %21 = arith.cmpf ogt, %10, %20 : vector<16x2xf32>
    %cst_25 = arith.constant -1.000000e+30 : f32
    %22 = vector.shape_cast %19 : vector<16x1xf32> to vector<16x1xf32>
    %23 = vector.broadcast %22 : vector<16x1xf32> to vector<16x2xf32>
    %24 = vector.broadcast %cst_25 : f32 to vector<16x2xf32>
    %25 = arith.select %21, %23, %24 : vector<16x2xi1>, vector<16x2xf32>
    %cst_26 = arith.constant dense<0xFF800000> : vector<2xf32>
    %26 = vector.multi_reduction <maximumf>, %25, %cst_26 [0] : vector<16x2xf32> to vector<2xf32>
    %27 = vector.shape_cast %26 : vector<2xf32> to vector<1x2xf32>
    %28 = vector.broadcast %27 : vector<1x2xf32> to vector<16x2xf32>
    %29 = arith.mulf %10, %28 : vector<16x2xf32>
    %cst_27 = arith.constant dense<0.000000e+00> : vector<16xf32>
    %30 = vector.multi_reduction <add>, %29, %cst_27 [1] : vector<16x2xf32> to vector<16xf32>
    %31 = vector.shape_cast %30 : vector<16xf32> to vector<16x1xf32>
    %32 = arith.subf %19, %31 : vector<16x1xf32>
    %33 = math.exp %32 : vector<16x1xf32>
    %34 = vector.broadcast %33 : vector<16x1xf32> to vector<16x2xf32>
    %35 = arith.mulf %10, %34 : vector<16x2xf32>
    %cst_28 = arith.constant dense<0.000000e+00> : vector<2xf32>
    %36 = vector.multi_reduction <add>, %35, %cst_28 [0] : vector<16x2xf32> to vector<2xf32>
    %37 = vector.shape_cast %36 : vector<2xf32> to vector<1x2xf32>
    %38 = vector.broadcast %37 : vector<1x2xf32> to vector<16x2xf32>
    %39 = arith.mulf %10, %38 : vector<16x2xf32>
    %cst_29 = arith.constant dense<0.000000e+00> : vector<16xf32>
    %40 = vector.multi_reduction <add>, %39, %cst_29 [1] : vector<16x2xf32> to vector<16xf32>
    %41 = vector.shape_cast %40 : vector<16xf32> to vector<16x1xf32>
    %cst_30 = arith.constant 1.000000e-30 : f32
    %42 = vector.broadcast %cst_30 : f32 to vector<16x1xf32>
    %43 = arith.maximumf %41, %42 : vector<16x1xf32>
    %44 = tpu.reciprocal %43 {approx = true} : vector<16x1xf32> -> vector<16x1xf32>
    %45 = arith.mulf %33, %44 : vector<16x1xf32>
    %46 = vector.broadcast %45 : vector<16x1xf32> to vector<16x32xf32>
    %47 = arith.mulf %46, %9 : vector<16x32xf32>
    %cst_31 = arith.constant dense<0.000000e+00> : vector<2x32xf32>
    %48 = tpu.matmul %11, %47, %cst_31 {dimension_numbers = #tpu.dot_dimension_numbers<[1], [0], [0], [1], [0, 0, 1, 1], [], []>} : vector<2x16xf32>, vector<16x32xf32>, vector<2x32xf32> -> vector<2x32xf32>
    %c0_32 = arith.constant 0 : index
    %c0_33 = arith.constant 0 : index
    %49 = vector.load %arg12[%c0_32, %c0_33] : memref<2x32xf32, #tpu.memory_space<vmem>>, vector<2x32xf32>
    tpu.vector_store %arg12[%c0_32, %c0_33], %48 {strides = array<i32>} : memref<2x32xf32, #tpu.memory_space<vmem>>, vector<2x32xf32>,
    return
  }
}

</mosaic_0001>

<llo_original>
// kernel: tpu_custom_call.1
$region0: #{tpu_custom_call.1}
  #allocation0 [shape = 'u32[]', space=smem, size = 0x4, offset = 0x4, fixed_abs, tag = 'smem constant byte address 0x4 - core index']
  #allocation1 [shape = 'u32[144,128]{1,0:T(1,128)}', space=vmem, size = 0x12000, scoped, tag = 'internal scratch']
  #allocation2 [shape = 'f32[1,1]{1,0:T(1,128)S(1)}', space=vmem, size = 0x200, scoped, tag = 'scoped memory for tpu_custom_call.1']
  %s0 = inlined_call_operand.vmem [shape: f32[16,32], index: 0, kind: input, shape index: {}]
  %s1 = inlined_call_operand.hbm [shape: bf16[2,16,16], index: 1, kind: input, shape index: {}]
  %s2 = inlined_call_operand.hbm [shape: f32[16,32], index: 2, kind: input, shape index: {}]
  %s3 = inlined_call_operand.hbm [shape: f32[2,16], index: 3, kind: input, shape index: {}]
  %s4 = inlined_call_operand.vmem [shape: f32[16,2], index: 4, kind: input, shape index: {}]
  %s5 = inlined_call_operand.hbm [shape: bf16[32,64], index: 5, kind: input, shape index: {}]
  %s6 = inlined_call_operand.hbm [shape: bf16[32,96], index: 6, kind: input, shape index: {}]
  %s7 = inlined_call_operand.vmem [shape: bf16[32,96], index: 7, kind: input, shape index: {}]
  %s8 = inlined_call_operand.vmem [shape: f32[1,96], index: 8, kind: input, shape index: {}]
  %s9 = inlined_call_operand.vmem [shape: f32[1,96], index: 9, kind: input, shape index: {}]
  %s10 = inlined_call_operand.vmem [shape: f32[1,32], index: 10, kind: input, shape index: {}]
  %s11 = inlined_call_operand.<no memory space> [shape: f32[1,1], index: 11, kind: input, shape index: {}]
  %s12 = inlined_call_operand.hbm [shape: f32[2,32], index: 12, kind: output, shape index: {}]
  %s13 = sld [smem:[#allocation0]]
  $region85: #{tpu_custom_call.1} parent=0
    _
  %s15 = ssub.s32 1, %s13
  %s16 = scalar_select 0, %s15, %s13
  %v17 = vstv %s11
  %18 = vst [vmem:[#allocation2] sm:$0x1] %v17
  $region1: #{tpu_custom_call.1} parent=0
    #allocation3 [shape = 'u8[8192]{0}', space=vmem, size = 0x2000, scoped, tag = 'input window, operand 1, single buffered']
    #allocation4 [shape = 's32[1]{0}', space=sflag, size = 0x4, scoped, tag = 'scoped memory for tpu_custom_call.1']
    #allocation5 [shape = 's32[1]{0}', space=sflag, size = 0x4, scoped, tag = 'scoped memory for tpu_custom_call.1']
    #allocation6 [shape = 'u8[8192]{0}', space=vmem, size = 0x2000, scoped, tag = 'input window, operand 2, single buffered']
    #allocation7 [shape = 's32[1]{0}', space=sflag, size = 0x4, scoped, tag = 'scoped memory for tpu_custom_call.1']
    #allocation8 [shape = 'u8[1024]{0}', space=vmem, size = 0x400, scoped, tag = 'input window, operand 3, single buffered']
    #allocation9 [shape = 'u8[8192]{0}', space=vmem, size = 0x2000, scoped, tag = 'input window, operand 5, single buffered']
    #allocation10 [shape = 's32[1]{0}', space=sflag, size = 0x4, scoped, tag = 'scoped memory for tpu_custom_call.1']
    #allocation11 [shape = 'u8[8192]{0}', space=vmem, size = 0x2000, scoped, tag = 'input window, operand 6, single buffered']
    #allocation12 [shape = 'u8[1024]{0}', space=vmem, size = 0x400, scoped, tag = 'output window, operand 0, single buffered']
    %19 = vsyncpa [#allocation4], 0
    %20 = vsyncpa [#allocation7], 0
    %21 = vsyncpa [#allocation10], 0
    %22 = vsyncpa [#allocation5], 0
    // Predicated region
    $region2: #{tpu_custom_call.1} parent=1 // pred_check
      _
    $region3: #{tpu_custom_call.1} parent=1 // pred_check_branch
      %24 = sbr.rel (0) target = $region5
    $region4: #{tpu_custom_call.1} parent=1 // pred_region
      _
    $region5: #{tpu_custom_call.1} parent=1 // pred_fallthru
      _
    // Predicated region
    $region6: #{tpu_custom_call.1} parent=1 // pred_check
      _
    $region7: #{tpu_custom_call.1} parent=1 // pred_check_branch
      %26 = sbr.rel (0) target = $region9
    $region8: #{tpu_custom_call.1} parent=1 // pred_region
      %s28 = ssub.s32 256, 256
      %29 = vsyncadd [#allocation4], %s28
      %s30 = sshll.u32 [#allocation3], 4
      %s31 = int_to_ptr.vmem [resolvable:$true] %s30
      %36 = dma.hbm_to_vmem [thread:$0]  %s1, 256, %s31, [#allocation4], 64, 64, 4
    $region9: #{tpu_custom_call.1} parent=1 // pred_fallthru
      _
    // Predicated region
    $region10: #{tpu_custom_call.1} parent=1 // pred_check
      _
    $region11: #{tpu_custom_call.1} parent=1 // pred_check_branch
      %38 = sbr.rel (0) target = $region13
    $region12: #{tpu_custom_call.1} parent=1 // pred_region
      %s40 = ssub.s32 256, 256
      %41 = vsyncadd [#allocation7], %s40
      %s42 = sshll.u32 [#allocation6], 4
      %s43 = int_to_ptr.vmem [resolvable:$true] %s42
      %48 = dma.hbm_to_vmem [thread:$0]  %s2, 256, %s43, [#allocation7], 128, 128, 8
    $region13: #{tpu_custom_call.1} parent=1 // pred_fallthru
      _
    // Predicated region
    $region14: #{tpu_custom_call.1} parent=1 // pred_check
      _
    $region15: #{tpu_custom_call.1} parent=1 // pred_check_branch
      %50 = sbr.rel (0) target = $region17
    $region16: #{tpu_custom_call.1} parent=1 // pred_region
      %s52 = ssub.s32 32, 32
      %53 = vsyncadd [#allocation7], %s52
      %s55 = sshll.u32 [#allocation8], 4
      %s56 = int_to_ptr.vmem [resolvable:$true] %s55
      %58 = dma.hbm_to_vmem [thread:$0]  %s3, 32, %s56, [#allocation7]
    $region17: #{tpu_custom_call.1} parent=1 // pred_fallthru
      _
    // Predicated region
    $region18: #{tpu_custom_call.1} parent=1 // pred_check
      _
    $region19: #{tpu_custom_call.1} parent=1 // pred_check_branch
      %60 = sbr.rel (0) target = $region21
    $region20: #{tpu_custom_call.1} parent=1 // pred_region
      _
    $region21: #{tpu_custom_call.1} parent=1 // pred_fallthru
      _
    // Predicated region
    $region22: #{tpu_custom_call.1} parent=1 // pred_check
      _
    $region23: #{tpu_custom_call.1} parent=1 // pred_check_branch
      %62 = sbr.rel (0) target = $region25
    $region24: #{tpu_custom_call.1} parent=1 // pred_region
      %s64 = ssub.s32 256, 256
      %65 = vsyncadd [#allocation10], %s64
      %s66 = sshll.u32 [#allocation9], 4
      %s67 = int_to_ptr.vmem [resolvable:$true] %s66
      %72 = dma.hbm_to_vmem [thread:$0]  %s5, 256, %s67, [#allocation10], 64, 64, 4
    $region25: #{tpu_custom_call.1} parent=1 // pred_fallthru
      _
    // Predicated region
    $region26: #{tpu_custom_call.1} parent=1 // pred_check
      _
    $region27: #{tpu_custom_call.1} parent=1 // pred_check_branch
      %74 = sbr.rel (0) target = $region29
    $region28: #{tpu_custom_call.1} parent=1 // pred_region
      %s76 = ssub.s32 256, 256
      %77 = vsyncadd [#allocation10], %s76
      %s78 = sshll.u32 [#allocation11], 4
      %s79 = int_to_ptr.vmem [resolvable:$true] %s78
      %84 = dma.hbm_to_vmem [thread:$0]  %s6, 256, %s79, [#allocation10], 64, 64, 4
    $region29: #{tpu_custom_call.1} parent=1 // pred_fallthru
      _
    // Predicated region
    $region30: #{tpu_custom_call.1} parent=1 // pred_check
      _
    $region31: #{tpu_custom_call.1} parent=1 // pred_check_branch
      %86 = sbr.rel (0) target = $region33
    $region32: #{tpu_custom_call.1} parent=1 // pred_region
      _
    $region33: #{tpu_custom_call.1} parent=1 // pred_fallthru
      _
    // Predicated region
    $region34: #{tpu_custom_call.1} parent=1 // pred_check
      _
    $region35: #{tpu_custom_call.1} parent=1 // pred_check_branch
      %88 = sbr.rel (0) target = $region37
    $region36: #{tpu_custom_call.1} parent=1 // pred_region
      _
    $region37: #{tpu_custom_call.1} parent=1 // pred_fallthru
      _
    // Predicated region
    $region38: #{tpu_custom_call.1} parent=1 // pred_check
      _
    $region39: #{tpu_custom_call.1} parent=1 // pred_check_branch
      %90 = sbr.rel (0) target = $region41
    $region40: #{tpu_custom_call.1} parent=1 // pred_region
      _
    $region41: #{tpu_custom_call.1} parent=1 // pred_fallthru
      _
    // Predicated region
    $region42: #{tpu_custom_call.1} parent=1 // pred_check
      _
    $region43: #{tpu_custom_call.1} parent=1 // pred_check_branch
      %92 = sbr.rel (0) target = $region45
    $region44: #{tpu_custom_call.1} parent=1 // pred_region
      _
    $region45: #{tpu_custom_call.1} parent=1 // pred_fallthru
      _
    // Predicated region
    $region46: #{tpu_custom_call.1} parent=1 // pred_check
      _
    $region47: #{tpu_custom_call.1} parent=1 // pred_check_branch
      %94 = sbr.rel (0) target = $region49
    $region48: #{tpu_custom_call.1} parent=1 // pred_region
      _
    $region49: #{tpu_custom_call.1} parent=1 // pred_fallthru
      _
    // Predicated region
    $region50: #{tpu_custom_call.1} parent=1 // pred_check
      _
    $region51: #{tpu_custom_call.1} parent=1 // pred_check_branch
      %96 = sbr.rel (0) target = $region53
    $region52: #{tpu_custom_call.1} parent=1 // pred_region
      %97 = dma.done [#allocation4], 256
    $region53: #{tpu_custom_call.1} parent=1 // pred_fallthru
      _
    // Predicated region
    $region54: #{tpu_custom_call.1} parent=1 // pred_check
      _
    $region55: #{tpu_custom_call.1} parent=1 // pred_check_branch
      %99 = sbr.rel (0) target = $region57
    $region56: #{tpu_custom_call.1} parent=1 // pred_region
      %100 = dma.done [#allocation7], 256
    $region57: #{tpu_custom_call.1} parent=1 // pred_fallthru
      _
    // Predicated region
    $region58: #{tpu_custom_call.1} parent=1 // pred_check
      _
    $region59: #{tpu_custom_call.1} parent=1 // pred_check_branch
      %102 = sbr.rel (0) target = $region61
    $region60: #{tpu_custom_call.1} parent=1 // pred_region
      %103 = dma.done [#allocation7], 32
    $region61: #{tpu_custom_call.1} parent=1 // pred_fallthru
      _
    // Predicated region
    $region62: #{tpu_custom_call.1} parent=1 // pred_check
      _
    $region63: #{tpu_custom_call.1} parent=1 // pred_check_branch
      %105 = sbr.rel (0) target = $region65
    $region64: #{tpu_custom_call.1} parent=1 // pred_region
      %106 = dma.done [#allocation10], 256
    $region65: #{tpu_custom_call.1} parent=1 // pred_fallthru
      _
    // Predicated region
    $region66: #{tpu_custom_call.1} parent=1 // pred_check
      _
    $region67: #{tpu_custom_call.1} parent=1 // pred_check_branch
      %108 = sbr.rel (0) target = $region69
    $region68: #{tpu_custom_call.1} parent=1 // pred_region
      %109 = dma.done [#allocation10], 256
    $region69: #{tpu_custom_call.1} parent=1 // pred_fallthru
      _
    %v111 = vld [vmem:[#allocation3] sm:$0xf]
    %v112 = vld [vmem:[#allocation3 + $0x4] sm:$0xf]
    %v113 = vld [vmem:[#allocation3 + $0x8] sm:$0xf]
    %v114 = vld [vmem:[#allocation3 + $0xc] sm:$0xf]
    %v115 = vld [vmem:[#allocation6] sm:$0xff]
    %v116 = vld [vmem:[#allocation6 + $0x8] sm:$0xff]
    %v117 = vld [vmem:[#allocation9] sm:$0xf]
    %v118 = vld [vmem:[#allocation9 + $0x4] sm:$0xf]
    %v119 = vld [vmem:[#allocation9 + $0x8] sm:$0xf]
    %v120 = vld [vmem:[#allocation9 + $0xc] sm:$0xf]
    %v121 = vld [vmem:[#allocation11] sm:$0xf]
    %v122 = vld [vmem:[#allocation11 + $0x4] sm:$0xf]
    %v123 = vld [vmem:[#allocation11 + $0x8] sm:$0xf]
    %v124 = vld [vmem:[#allocation11 + $0xc] sm:$0xf]
    %v125 = vld [vmem:[%s7] sm:$0xf]
    %v126 = vld [vmem:[%s7 + $0x4] sm:$0xf]
    %v127 = vld [vmem:[%s7 + $0x8] sm:$0xf]
    %v128 = vld [vmem:[%s7 + $0xc] sm:$0xf]
    %v129 = vld [vmem:[%s8] sm:$0x1]
    %v130 = vld [vmem:[%s9] sm:$0x1]
    %v131 = vld [vmem:[%s0] sm:$0xff]
    %v132 = vld [vmem:[%s0 + $0x8] sm:$0xff]
    loop: start=0, step=1, limit=3
    $region70: #{tpu_custom_call.1} parent=1 // loop_pre_header
      _
    $region71: #{tpu_custom_call.1} parent=1 // loop_header
      %s134 = sphi 0, %s138
      %p135 = scmp.ge.s32.totalorder %s134, 3
      %v139 = vphi %v131, %v492
      %v140 = vphi %v132, %v494
    $region72: #{tpu_custom_call.1} parent=1 // loop_header_branch
      %137 = sbr.rel (%p135) target = $region76
    $region73: #{tpu_custom_call.1} parent=1 // loop_body
      %v141 = vpack.c.bf16 %v140, %v139
      %v146 = vunpack.c.l.b16 %v117
      %v147 = vunpack.c.l.b16 %v118
      %v148 = vunpack.c.l.b16 %v119
      %v149 = vunpack.c.l.b16 %v120
      %v150 = vpack.c.b16 %v147, %v146
      %v151 = vpack.c.b16 %v149, %v148
      %vm154 = vcmask 261120
      %v156 = vsel %vm154, %v141, 0
      %158 = vmatprep.subr.bf16.mxu0 0
      %159 = vmatpush1.bf16.msra.mxu0 0
      %160 = vmatprep.subr.bf16.mxu0 0
      %161 = vmatpush1.bf16.msra.mxu0 0
      %162 = vmatprep.subr.bf16.mxu0 0
      %163 = vmatpush1.bf16.msra.mxu0 0
      %164 = vmatprep.subr.bf16.mxu0 0
      %165 = vmatpush1.bf16.msra.mxu0 0
      %166 = vmatprep.subr.bf16.mxu0 0
      %167 = vmatpush1.bf16.msra.mxu0 0
      %168 = vmatprep.subr.bf16.mxu0 0
      %169 = vmatpush1.bf16.msra.mxu0 0
      %170 = vmatprep.subr.bf16.mxu0 0
      %171 = vmatpush1.bf16.msra.mxu0 %v151
      %172 = vmatprep.subr.bf16.mxu0 0
      %173 = vmatpush1.bf16.msra.mxu0 %v150
      %174 = vmatprep.subr.bf16.mxu0 0
      %175 = vmatpush2.bf16.msra.mxu0 0
      %176 = vmatprep.subr.bf16.mxu0 0
      %177 = vmatpush2.bf16.msra.mxu0 0
      %178 = vmatprep.subr.bf16.mxu0 0
      %179 = vmatpush2.bf16.msra.mxu0 0
      %180 = vmatprep.subr.bf16.mxu0 0
      %181 = vmatpush2.bf16.msra.mxu0 0
      %182 = vmatprep.subr.bf16.mxu0 0
      %183 = vmatpush2.bf16.msra.mxu0 0
      %184 = vmatprep.subr.bf16.mxu0 0
      %185 = vmatpush2.bf16.msra.mxu0 0
      %186 = vmatprep.subr.bf16.mxu0 0
      %187 = vmatpush2.bf16.msra.mxu0 0
      %188 = vmatprep.subr.bf16.mxu0 0
      %189 = vmatpush2.bf16.msra.mxu0 0
      %190 = vmatprep.mubr.bf16.mxu0 0
      %191 = vmatmul.mubr.bf16.gmra.mxu0 %v156
      %v192 = vpop.f32.mrf.mxu0
      %v193 = vadd.f32 0.0, %v192
      %v194 = vpop.f32.mrf.mxu0
      %v195 = vpop.f32.mrf.mxu0
      %v196 = vadd.f32 0.0, %v195
      %v197 = vpop.f32.mrf.mxu0
      %198 = vdwg.mxu0
      %v199 = vpack.c.bf16 %v196, %v193
      %v202 = vunpack.c.l.b16 %v111
      %v203 = vunpack.c.l.b16 %v112
      %v204 = vpack.c.b16 %v203, %v202
      %vm205 = vcmask 130048
      %v207 = vsel %vm205, %v204, 0
      %209 = vmatprep.subr.bf16.mxu0 0
      %210 = vmatpush1.bf16.msra.mxu0 0
      %211 = vmatprep.subr.bf16.mxu0 0
      %212 = vmatpush1.bf16.msra.mxu0 0
      %213 = vmatprep.subr.bf16.mxu0 0
      %214 = vmatpush1.bf16.msra.mxu0 0
      %215 = vmatprep.subr.bf16.mxu0 0
      %216 = vmatpush1.bf16.msra.mxu0 0
      %217 = vmatprep.subr.bf16.mxu0 0
      %218 = vmatpush1.bf16.msra.mxu0 0
      %219 = vmatprep.subr.bf16.mxu0 0
      %220 = vmatpush1.bf16.msra.mxu0 0
      %221 = vmatprep.subr.bf16.mxu0 0
      %222 = vmatpush1.bf16.msra.mxu0 0
      %223 = vmatprep.subr.bf16.mxu0 0
      %224 = vmatpush1.bf16.msra.mxu0 %v199
      %225 = vmatprep.subr.bf16.mxu0 0
      %226 = vmatpush2.bf16.msra.mxu0 0
      %227 = vmatprep.subr.bf16.mxu0 0
      %228 = vmatpush2.bf16.msra.mxu0 0
      %229 = vmatprep.subr.bf16.mxu0 0
      %230 = vmatpush2.bf16.msra.mxu0 0
      %231 = vmatprep.subr.bf16.mxu0 0
      %232 = vmatpush2.bf16.msra.mxu0 0
      %233 = vmatprep.subr.bf16.mxu0 0
      %234 = vmatpush2.bf16.msra.mxu0 0
      %235 = vmatprep.subr.bf16.mxu0 0
      %236 = vmatpush2.bf16.msra.mxu0 0
      %237 = vmatprep.subr.bf16.mxu0 0
      %238 = vmatpush2.bf16.msra.mxu0 0
      %239 = vmatprep.subr.bf16.mxu0 0
      %240 = vmatpush2.bf16.msra.mxu0 0
      %241 = vmatprep.mubr.bf16.mxu0 0
      %242 = vmatmul.mubr.bf16.gmra.mxu0 %v207
      %v243 = vpop.f32.mrf.mxu0
      %v244 = vadd.f32 0.0, %v243
      %v245 = vpop.f32.mrf.mxu0
      %v246 = vpop.f32.mrf.mxu0
      %v247 = vadd.f32 0.0, %v246
      %v248 = vpop.f32.mrf.mxu0
      %249 = vdwg.mxu0
      %v250 = vadd.f32 %v115, %v244
      %v251 = vadd.f32 %v116, %v247
      %v254 = vunpack.c.l.b16 %v113
      %v255 = vunpack.c.l.b16 %v114
      %v256 = vpack.c.b16 %v255, %v254
      %258 = vrot.lane.b32.xlu0 %v199, 96
      %v259 = vpop.permute.xlu0 %258
      %v262 = vsel %vm205, %v256, 0
      %264 = vmatprep.subr.bf16.mxu0 0
      %265 = vmatpush1.bf16.msra.mxu0 0
      %266 = vmatprep.subr.bf16.mxu0 0
      %267 = vmatpush1.bf16.msra.mxu0 0
      %268 = vmatprep.subr.bf16.mxu0 0
      %269 = vmatpush1.bf16.msra.mxu0 0
      %270 = vmatprep.subr.bf16.mxu0 0
      %271 = vmatpush1.bf16.msra.mxu0 0
      %272 = vmatprep.subr.bf16.mxu0 0
      %273 = vmatpush1.bf16.msra.mxu0 0
      %274 = vmatprep.subr.bf16.mxu0 0
      %275 = vmatpush1.bf16.msra.mxu0 0
      %276 = vmatprep.subr.bf16.mxu0 0
      %277 = vmatpush1.bf16.msra.mxu0 0
      %278 = vmatprep.subr.bf16.mxu0 0
      %279 = vmatpush1.bf16.msra.mxu0 %v259
      %280 = vmatprep.subr.bf16.mxu0 0
      %281 = vmatpush2.bf16.msra.mxu0 0
      %282 = vmatprep.subr.bf16.mxu0 0
      %283 = vmatpush2.bf16.msra.mxu0 0
      %284 = vmatprep.subr.bf16.mxu0 0
      %285 = vmatpush2.bf16.msra.mxu0 0
      %286 = vmatprep.subr.bf16.mxu0 0
      %287 = vmatpush2.bf16.msra.mxu0 0
      %288 = vmatprep.subr.bf16.mxu0 0
      %289 = vmatpush2.bf16.msra.mxu0 0
      %290 = vmatprep.subr.bf16.mxu0 0
      %291 = vmatpush2.bf16.msra.mxu0 0
      %292 = vmatprep.subr.bf16.mxu0 0
      %293 = vmatpush2.bf16.msra.mxu0 0
      %294 = vmatprep.subr.bf16.mxu0 0
      %295 = vmatpush2.bf16.msra.mxu0 0
      %296 = vmatprep.mubr.bf16.mxu0 0
      %297 = vmatmul.mubr.bf16.gmra.mxu0 %v262
      %v298 = vpop.f32.mrf.mxu0
      %v299 = vadd.f32 0.0, %v298
      %v300 = vpop.f32.mrf.mxu0
      %v301 = vpop.f32.mrf.mxu0
      %v302 = vadd.f32 0.0, %v301
      %v303 = vpop.f32.mrf.mxu0
      %304 = vdwg.mxu0
      %v305 = vadd.f32 %v250, %v299
      %v306 = vadd.f32 %v251, %v302
      %v307 = vpack.c.bf16 %v306, %v305
      %v309 = vlaneseq
      %v310 = vshrl.u32 %v309, 7
      %v311 = vsub.s32 0, %v310
      %v312 = vrot.slane %v129, %v311
      %v318 = vunpack.c.l.b16 %v121
      %v319 = vunpack.c.l.b16 %v122
      %v320 = vunpack.c.l.b16 %v123
      %v321 = vunpack.c.l.b16 %v124
      %v322 = vpack.c.b16 %v319, %v318
      %v323 = vpack.c.b16 %v321, %v320
      %v327 = vsel %vm154, %v307, 0
      %329 = vmatprep.subr.bf16.mxu0 0
      %330 = vmatpush1.bf16.msra.mxu0 0
      %331 = vmatprep.subr.bf16.mxu0 0
      %332 = vmatpush1.bf16.msra.mxu0 0
      %333 = vmatprep.subr.bf16.mxu0 0
      %334 = vmatpush1.bf16.msra.mxu0 0
      %335 = vmatprep.subr.bf16.mxu0 0
      %336 = vmatpush1.bf16.msra.mxu0 0
      %337 = vmatprep.subr.bf16.mxu0 0
      %338 = vmatpush1.bf16.msra.mxu0 0
      %339 = vmatprep.subr.bf16.mxu0 0
      %340 = vmatpush1.bf16.msra.mxu0 0
      %341 = vmatprep.subr.bf16.mxu0 0
      %342 = vmatpush1.bf16.msra.mxu0 %v323
      %343 = vmatprep.subr.bf16.mxu0 0
      %344 = vmatpush1.bf16.msra.mxu0 %v322
      %345 = vmatprep.subr.bf16.mxu0 0
      %346 = vmatpush2.bf16.msra.mxu0 0
      %347 = vmatprep.subr.bf16.mxu0 0
      %348 = vmatpush2.bf16.msra.mxu0 0
      %349 = vmatprep.subr.bf16.mxu0 0
      %350 = vmatpush2.bf16.msra.mxu0 0
      %351 = vmatprep.subr.bf16.mxu0 0
      %352 = vmatpush2.bf16.msra.mxu0 0
      %353 = vmatprep.subr.bf16.mxu0 0
      %354 = vmatpush2.bf16.msra.mxu0 0
      %355 = vmatprep.subr.bf16.mxu0 0
      %356 = vmatpush2.bf16.msra.mxu0 0
      %357 = vmatprep.subr.bf16.mxu0 0
      %358 = vmatpush2.bf16.msra.mxu0 0
      %359 = vmatprep.subr.bf16.mxu0 0
      %360 = vmatpush2.bf16.msra.mxu0 0
      %361 = vmatprep.mubr.bf16.mxu0 0
      %362 = vmatmul.mubr.bf16.gmra.mxu0 %v327
      %v363 = vpop.f32.mrf.mxu0
      %v364 = vadd.f32 %v312, %v363
      %v365 = vpop.f32.mrf.mxu0
      %v366 = vpop.f32.mrf.mxu0
      %v367 = vadd.f32 %v312, %v366
      %v368 = vpop.f32.mrf.mxu0
      %369 = vdwg.mxu0
      %v371 = vlaneseq
      %v372 = vshrl.u32 %v371, 7
      %v373 = vsub.s32 0, %v372
      %v374 = vrot.slane %v130, %v373
      %v380 = vunpack.c.l.b16 %v125
      %v381 = vunpack.c.l.b16 %v126
      %v382 = vunpack.c.l.b16 %v127
      %v383 = vunpack.c.l.b16 %v128
      %v384 = vpack.c.b16 %v381, %v380
      %v385 = vpack.c.b16 %v383, %v382
      %388 = vmatprep.subr.bf16.mxu0 0
      %389 = vmatpush1.bf16.msra.mxu0 0
      %390 = vmatprep.subr.bf16.mxu0 0
      %391 = vmatpush1.bf16.msra.mxu0 0
      %392 = vmatprep.subr.bf16.mxu0 0
      %393 = vmatpush1.bf16.msra.mxu0 0
      %394 = vmatprep.subr.bf16.mxu0 0
      %395 = vmatpush1.bf16.msra.mxu0 0
      %396 = vmatprep.subr.bf16.mxu0 0
      %397 = vmatpush1.bf16.msra.mxu0 0
      %398 = vmatprep.subr.bf16.mxu0 0
      %399 = vmatpush1.bf16.msra.mxu0 0
      %400 = vmatprep.subr.bf16.mxu0 0
      %401 = vmatpush1.bf16.msra.mxu0 %v385
      %402 = vmatprep.subr.bf16.mxu0 0
      %403 = vmatpush1.bf16.msra.mxu0 %v384
      %404 = vmatprep.subr.bf16.mxu0 0
      %405 = vmatpush2.bf16.msra.mxu0 0
      %406 = vmatprep.subr.bf16.mxu0 0
      %407 = vmatpush2.bf16.msra.mxu0 0
      %408 = vmatprep.subr.bf16.mxu0 0
      %409 = vmatpush2.bf16.msra.mxu0 0
      %410 = vmatprep.subr.bf16.mxu0 0
      %411 = vmatpush2.bf16.msra.mxu0 0
      %412 = vmatprep.subr.bf16.mxu0 0
      %413 = vmatpush2.bf16.msra.mxu0 0
      %414 = vmatprep.subr.bf16.mxu0 0
      %415 = vmatpush2.bf16.msra.mxu0 0
      %416 = vmatprep.subr.bf16.mxu0 0
      %417 = vmatpush2.bf16.msra.mxu0 0
      %418 = vmatprep.subr.bf16.mxu0 0
      %419 = vmatpush2.bf16.msra.mxu0 0
      %420 = vmatprep.mubr.bf16.mxu0 0
      %421 = vmatmul.mubr.bf16.gmra.mxu0 %v156
      %v422 = vpop.f32.mrf.mxu0
      %v423 = vadd.f32 %v374, %v422
      %v424 = vpop.f32.mrf.mxu0
      %v425 = vpop.f32.mrf.mxu0
      %v426 = vadd.f32 %v374, %v425
      %v427 = vpop.f32.mrf.mxu0
      %428 = vdwg.mxu0
      %v429 = vadd.f32 %v364, %v423
      %v430 = vadd.f32 %v367, %v426
      %v431 = vxor.u32 %v429, 2147483648
      %v432 = vxor.u32 %v430, 2147483648
      %v433 = vmul.f32 %v431, 1.442695
      %v434 = vpow.pop %v433
      %v435 = vmul.f32 %v432, 1.442695
      %v436 = vpow.pop %v435
      %v437 = vadd.f32 %v434, 1.0
      %v438 = vadd.f32 %v436, 1.0
      %v439 = vrcp.pop %v437
      %v440 = vmul.f32 1.0, %v439
      %v441 = vrcp.pop %v438
      %v442 = vmul.f32 1.0, %v441
      %445 = vrot.lane.b32.xlu0 %v423, 64
      %v446 = vpop.permute.xlu0 %445
      %447 = vrot.lane.b32.xlu0 %v426, 64
      %v448 = vpop.permute.xlu0 %447
      %v451 = vmul.f32 %v440, %v446
      %v452 = vmul.f32 %v442, %v448
      %455 = vrot.lane.b32.xlu0 %v451, 64
      %v456 = vpop.permute.xlu0 %455
      %457 = vrot.lane.b32.xlu0 %v452, 64
      %v458 = vpop.permute.xlu0 %457
      %v461 = vadd.f32 %v364, %v456
      %v462 = vadd.f32 %v367, %v458
      %v463 = vtanh.pop %v461
      %v464 = vtanh.pop %v462
      %v465 = vsub.f32 1.0, %v440
      %v466 = vsub.f32 1.0, %v442
      %469 = vrot.lane.b32.xlu0 %v463, 96
      %v470 = vpop.permute.xlu0 %469
      %471 = vrot.lane.b32.xlu0 %v464, 96
      %v472 = vpop.permute.xlu0 %471
      %v475 = vmul.f32 %v465, %v470
      %v476 = vmul.f32 %v466, %v472
      %479 = vrot.lane.b32.xlu0 %v139, 32
      %v480 = vpop.permute.xlu0 %479
      %481 = vrot.lane.b32.xlu0 %v140, 32
      %v482 = vpop.permute.xlu0 %481
      %v485 = vmul.f32 %v440, %v480
      %v486 = vmul.f32 %v442, %v482
      %v487 = vadd.f32 %v475, %v485
      %v488 = vadd.f32 %v476, %v486
      %491 = vrot.lane.b32.xlu0 %v487, 96
      %v492 = vpop.permute.xlu0 %491
      %493 = vrot.lane.b32.xlu0 %v488, 96
      %v494 = vpop.permute.xlu0 %493
    $region74: #{tpu_custom_call.1} parent=1 // loop_footer
      %s138 = sadd.s32 1, %s134
    $region75: #{tpu_custom_call.1} parent=1 // loop_footer_branch
      %133 = sbr.rel target = $region71
    $region76: #{tpu_custom_call.1} parent=1 // loop_exit
      _
    %v497 = vld [vmem:[%s4] sm:$0xff]
    %v498 = vld [vmem:[%s4 + $0x8] sm:$0xff]
    %v499 = vld [vmem:[#allocation8] sm:$0x3]
    %v500 = vld [vmem:[%s10] sm:$0x1]
    %v502 = vlaneseq
    %v503 = vshrl.u32 %v502, 7
    %v504 = vsub.s32 0, %v503
    %v505 = vrot.slane %v500, %v504
    %v507 = vmul.f32 %v139, %v505
    %v508 = vmul.f32 %v140, %v505
    %vm509 = vcmask 261120
    %v510 = vsel %vm509, %v507, 0.0
    %511 = vadd.xlane.f32.xlu0 %v510
    %v512 = vpop.xlane.xlu0 %511
    %v513 = vsel %vm509, %v508, 0.0
    %514 = vadd.xlane.f32.xlu0 %v513
    %v515 = vpop.xlane.xlu0 %514
    %v516 = vld [vmem:[#allocation2] sm:$0x1]
    %v518 = vlaneseq
    %v519 = vshrl.u32 %v518, 7
    %v520 = vsub.s32 0, %v519
    %v521 = vrot.slane %v516, %v520
    %v523 = vadd.f32 %v512, %v521
    %v524 = vadd.f32 %v515, %v521
    %vm525 = vcmp.gt.f32.partialorder %v497, 0.5
    %vm526 = vcmp.gt.f32.partialorder %v498, 0.5
    %528 = vset.pattern.permute.xlu0 0
    %529 = vperm.xlu0 %528, %v523
    %v530 = vpop.permute.xlu0 %529
    %533 = vset.pattern.permute.xlu0 0
    %534 = vperm.xlu0 %533, %v524
    %v535 = vpop.permute.xlu0 %534
    %v537 = vsel %vm525, %v530, -1e+30
    %v538 = vsel %vm526, %v535, -1e+30
    %vm539 = vcmask 15360
    %v540 = vsel %vm539, %v537, -inf
    %v541 = vsel %vm539, %v538, -inf
    %v542 = vmax.f32 %v540, %v541
    %v543 = vrot.slane %v542, 4
    %v544 = vmax.f32 %v542, %v543
    %v545 = vrot.slane %v544, 2
    %v546 = vmax.f32 %v544, %v545
    %v547 = vrot.slane %v546, 1
    %v548 = vmax.f32 %v546, %v547
    %v549 = vmul.f32 %v497, %v548
    %v550 = vmul.f32 %v498, %v548
    %v551 = vsel %vm539, %v549, 0.0
    %552 = vadd.xlane.f32.xlu0 %v551
    %v553 = vpop.xlane.xlu0 %552
    %v554 = vsel %vm539, %v550, 0.0
    %555 = vadd.xlane.f32.xlu0 %v554
    %v556 = vpop.xlane.xlu0 %555
    %v557 = vsub.f32 %v523, %v553
    %v558 = vsub.f32 %v524, %v556
    %v559 = vmul.f32 %v557, 1.442695
    %v560 = vpow.pop %v559
    %v561 = vmul.f32 %v558, 1.442695
    %v562 = vpow.pop %v561
    %564 = vset.pattern.permute.xlu0 0
    %565 = vperm.xlu0 %564, %v560
    %v566 = vpop.permute.xlu0 %565
    %569 = vset.pattern.permute.xlu0 0
    %570 = vperm.xlu0 %569, %v562
    %v571 = vpop.permute.xlu0 %570
    %v573 = vmul.f32 %v497, %v566
    %v574 = vmul.f32 %v498, %v571
    %v575 = vsel %vm539, %v573, 0.0
    %v576 = vsel %vm539, %v574, 0.0
    %v577 = vadd.f32 %v575, %v576
    %v578 = vrot.slane %v577, 4
    %v579 = vadd.f32 %v577, %v578
    %v580 = vrot.slane %v579, 2
    %v581 = vadd.f32 %v579, %v580
    %v582 = vrot.slane %v581, 1
    %v583 = vadd.f32 %v581, %v582
    %v584 = vmul.f32 %v497, %v583
    %v585 = vmul.f32 %v498, %v583
    %v586 = vsel %vm539, %v584, 0.0
    %587 = vadd.xlane.f32.xlu0 %v586
    %v588 = vpop.xlane.xlu0 %587
    %v589 = vsel %vm539, %v585, 0.0
    %590 = vadd.xlane.f32.xlu0 %v589
    %v591 = vpop.xlane.xlu0 %590
    %v592 = vmax.f32 %v588, 1e-30
    %v593 = vmax.f32 %v591, 1e-30
    %v594 = vrcp.pop %v592
    %v595 = vrcp.pop %v593
    %v596 = vmul.f32 %v560, %v594
    %v597 = vmul.f32 %v562, %v595
    %599 = vset.pattern.permute.xlu0 0
    %600 = vperm.xlu0 %599, %v596
    %v601 = vpop.permute.xlu0 %600
    %604 = vset.pattern.permute.xlu0 0
    %605 = vperm.xlu0 %604, %v597
    %v606 = vpop.permute.xlu0 %605
    %v608 = vmul.f32 %v601, %v139
    %v609 = vmul.f32 %v606, %v140
    %vm610 = vcmask 130048
    %v612 = vsel %vm610, %v499, 0
    %614 = vmatprep.subr.mxu0 0.0
    %615 = vmatpush1.msra.mxu0 0.0
    %616 = vmatprep.subr.mxu0 0.0
    %617 = vmatpush1.msra.mxu0 0.0
    %618 = vmatprep.subr.mxu0 0.0
    %619 = vmatpush1.msra.mxu0 0.0
    %620 = vmatprep.subr.mxu0 0.0
    %621 = vmatpush1.msra.mxu0 0.0
    %622 = vmatprep.subr.mxu0 0.0
    %623 = vmatpush1.msra.mxu0 0.0
    %624 = vmatprep.subr.mxu0 0.0
    %625 = vmatpush1.msra.mxu0 0.0
    %626 = vmatprep.subr.mxu0 0.0
    %627 = vmatpush1.msra.mxu0 0.0
    %628 = vmatprep.subr.mxu0 0.0
    %629 = vmatpush1.msra.mxu0 0.0
    %630 = vmatprep.subr.mxu0 0.0
    %631 = vmatpush1.msra.mxu0 0.0
    %632 = vmatprep.subr.mxu0 0.0
    %633 = vmatpush1.msra.mxu0 0.0
    %634 = vmatprep.subr.mxu0 0.0
    %635 = vmatpush1.msra.mxu0 0.0
    %636 = vmatprep.subr.mxu0 0.0
    %637 = vmatpush1.msra.mxu0 0.0
    %638 = vmatprep.subr.mxu0 0.0
    %639 = vmatpush1.msra.mxu0 0.0
    %640 = vmatprep.subr.mxu0 0.0
    %641 = vmatpush1.msra.mxu0 0.0
    %642 = vmatprep.subr.mxu0 0.0
    %643 = vmatpush1.msra.mxu0 %v609
    %644 = vmatprep.subr.mxu0 0.0
    %645 = vmatpush1.msra.mxu0 %v608
    %646 = vmatprep.subr.mxu0 0.0
    %647 = vmatpush2.msra.mxu0 0.0
    %648 = vmatprep.subr.mxu0 0.0
    %649 = vmatpush2.msra.mxu0 0.0
    %650 = vmatprep.subr.mxu0 0.0
    %651 = vmatpush2.msra.mxu0 0.0
    %652 = vmatprep.subr.mxu0 0.0
    %653 = vmatpush2.msra.mxu0 0.0
    %654 = vmatprep.subr.mxu0 0.0
    %655 = vmatpush2.msra.mxu0 0.0
    %656 = vmatprep.subr.mxu0 0.0
    %657 = vmatpush2.msra.mxu0 0.0
    %658 = vmatprep.subr.mxu0 0.0
    %659 = vmatpush2.msra.mxu0 0.0
    %660 = vmatprep.subr.mxu0 0.0
    %661 = vmatpush2.msra.mxu0 0.0
    %662 = vmatprep.subr.mxu0 0.0
    %663 = vmatpush2.msra.mxu0 0.0
    %664 = vmatprep.subr.mxu0 0.0
    %665 = vmatpush2.msra.mxu0 0.0
    %666 = vmatprep.subr.mxu0 0.0
    %667 = vmatpush2.msra.mxu0 0.0
    %668 = vmatprep.subr.mxu0 0.0
    %669 = vmatpush2.msra.mxu0 0.0
    %670 = vmatprep.subr.mxu0 0.0
    %671 = vmatpush2.msra.mxu0 0.0
    %672 = vmatprep.subr.mxu0 0.0
    %673 = vmatpush2.msra.mxu0 0.0
    %674 = vmatprep.subr.mxu0 0.0
    %675 = vmatpush2.msra.mxu0 0.0
    %676 = vmatprep.subr.mxu0 0.0
    %677 = vmatpush2.msra.mxu0 0.0
    %678 = vmatprep.mubr.f32.mxu0 0.0
    %679 = vmatmul.mubr.f32.gmra.mxu0 %v612
    %v680 = vpop.f32.mrf.mxu0
    %v681 = vadd.f32 0.0, %v680
    %v682 = vpop.f32.mrf.mxu0
    %683 = vdwg.mxu0
    %vm684 = vcmask 254976
    %685 = vst.msk [vmem:[#allocation12] sm:$0x3] %vm684, %v681
    // Predicated region
    $region77: #{tpu_custom_call.1} parent=1 // pred_check
      _
    $region78: #{tpu_custom_call.1} parent=1 // pred_check_branch
      %687 = sbr.rel (0) target = $region80
    $region79: #{tpu_custom_call.1} parent=1 // pred_region
      %s689 = ssub.s32 32, 32
      %690 = vsyncadd [#allocation5], %s689
      %s692 = sshll.u32 [#allocation12], 4
      %s693 = int_to_ptr.vmem [resolvable:$true] %s692
      %695 = dma.vmem_to_hbm [thread:$0]  %s693, 32, %s12, [#allocation5]
    $region80: #{tpu_custom_call.1} parent=1 // pred_fallthru
      _
    // Predicated region
    $region81: #{tpu_custom_call.1} parent=1 // pred_check
      _
    $region82: #{tpu_custom_call.1} parent=1 // pred_check_branch
      %697 = sbr.rel (0) target = $region84
    $region83: #{tpu_custom_call.1} parent=1 // pred_region
      %698 = dma.done [#allocation5], 32
    $region84: #{tpu_custom_call.1} parent=1 // pred_fallthru
      _
    %699 = vsyncpa [#allocation4], 1
    %700 = vsyncpa [#allocation7], 1
    %701 = vsyncpa [#allocation10], 1
    %702 = vsyncpa [#allocation5], 1

</llo_original>
